<compile_context>
chip_gen: v6e
topology: v6e:2x2x1
jax: 0.10.0
libtpu: 0.0.40
codegen_flags: <defaults>
</compile_context>

<pallas_src>
import jax
import jax.numpy as jnp
from jax.experimental import pallas as pl
from jax.experimental.pallas import tpu as pltpu


def _upconv_kernel(xm_ref, xh_ref, w_ref, shift_ref, o_ref):
    # xm_ref:    (1, TH, Wp, Cin)    bf16  main padded-input rows of this tile
    # xh_ref:    (1, 2,  Wp, Cin)    bf16  2-row halo directly below xm
    # w_ref:     (9*Cin, 4*Cout)     bf16  phase-combined weights (BN scale folded)
    # shift_ref: (1, 4*Cout)         f32   per-(phase, channel) shift (bias/BN folded)
    # o_ref:     (1, TH, W, 4*Cout)  f32   4 output phases stacked on channel axis
    _, TH, Wp, Cin = xm_ref.shape
    W = Wp - 2
    K = w_ref.shape[0]
    Cout4 = w_ref.shape[1]

    # Window of padded rows needed by this tile: TH main rows + 2 halo rows.
    xw = jnp.concatenate([xm_ref[0], xh_ref[0]], axis=0)        # (TH+2, Wp, Cin)

    # im2col: column taps (lane concat), then row taps (cheap major-dim slices).
    xc = jnp.concatenate([xw[:, t:t + W, :] for t in range(3)],
                         axis=-1)                               # (TH+2, W, 3*Cin)
    patch = jnp.concatenate([xc[s:s + TH] for s in range(3)],
                            axis=-1)                            # (TH, W, 9*Cin)

    # Single fused matmul: K = 9*Cin, N = 4*Cout, f32 accumulation on the MXU.
    acc = jnp.dot(patch.reshape(TH * W, K), w_ref[...],
                  preferred_element_type=jnp.float32)           # (TH*W, 4*Cout)

    y = jnp.maximum(acc + shift_ref[...], 0.0)                  # fused bias/BN + ReLU
    o_ref[0] = y.reshape(TH, W, Cout4).astype(o_ref.dtype)


def _pick_row_tile(h, target=128):
    # Largest even divisor of h that is <= target (bounds VMEM per grid step).
    best = None
    for cand in range(2, min(h, target) + 1, 2):
        if h % cand == 0:
            best = cand
    if best is None:
        # TODO(synk): odd H would need a different halo scheme.
        best = h
    return best


def up_conv_forward(x_nchw, w_oihw, conv_bias, gamma, beta, run_mean, run_var,
                    eps=1e-5, row_tile=None):
    """x_nchw: (N, Cin, H, W) float32 -> (N, Cout, 2H, 2W) float32."""
    N, Cin, H, W = x_nchw.shape
    Cout = w_oihw.shape[0]

    if row_tile is None:
        row_tile = _pick_row_tile(H)
    assert H % row_tile == 0 and row_tile % 2 == 0, (H, row_tile)
    n_row_tiles = H // row_tile
    Wp = W + 2

    # NCHW -> NHWC and 1-pixel zero pad of the ORIGINAL image (no 4x upsample copy).
    x = jnp.transpose(x_nchw, (0, 2, 3, 1))                      # (N, H, W, Cin)
    xp = jnp.pad(x, ((0, 0), (1, 1), (1, 1), (0, 0))).astype(jnp.bfloat16)

    # Fold conv bias + eval-mode BN into per-channel scale/shift; fold scale into W.
    w_hwio = jnp.transpose(w_oihw, (2, 3, 1, 0)).astype(jnp.float32)  # (3,3,Cin,Cout)
    scale = gamma / jnp.sqrt(run_var + eps)
    shift = (conv_bias - run_mean) * scale + beta
    w_scaled = w_hwio * scale[None, None, None, :]

    # Phase decomposition of upsample-x2 + 3x3 conv:
    #   y[2i+p, 2j+q, o] = sum_{s,t,c} B[p,s,kh] B[q,t,kw] w[kh,kw,c,o] * xp[i+s, j+t, c]
    B = jnp.array([[[1., 0., 0.], [0., 1., 1.], [0., 0., 0.]],
                   [[0., 0., 0.], [1., 1., 0.], [0., 0., 1.]]], jnp.float32)
    w_phase = jnp.einsum('psh,qtw,hwio->stipqo', B, B, w_scaled)  # (3,3,Cin,2,2,Cout)
    w_mat = w_phase.reshape(9 * Cin, 4 * Cout).astype(jnp.bfloat16)
    shift4 = jnp.tile(shift, 4).reshape(1, 4 * Cout).astype(jnp.float32)

    out4 = pl.pallas_call(
        _upconv_kernel,
        out_shape=jax.ShapeDtypeStruct((N, H, W, 4 * Cout), jnp.float32),
        grid_spec=pltpu.PrefetchScalarGridSpec(
            num_scalar_prefetch=0,
            grid=(N, n_row_tiles),
            in_specs=[
                # main rows [k*RT, (k+1)*RT) of the padded image
                pl.BlockSpec((1, row_tile, Wp, Cin), lambda n, k: (n, k, 0, 0)),
                # 2-row halo [(k+1)*RT, (k+1)*RT + 2) (RT even => integer block index)
                pl.BlockSpec((1, 2, Wp, Cin),
                             lambda n, k: (n, (k + 1) * (row_tile // 2), 0, 0)),
                # weights / shift stay resident (constant block index)
                pl.BlockSpec((9 * Cin, 4 * Cout), lambda n, k: (0, 0)),
                pl.BlockSpec((1, 4 * Cout), lambda n, k: (0, 0)),
            ],
            out_specs=pl.BlockSpec((1, row_tile, W, 4 * Cout),
                                   lambda n, k: (n, k, 0, 0)),
        ),
        compiler_params=pltpu.CompilerParams(
            dimension_semantics=("parallel", "parallel"),
            vmem_limit_bytes=32 * 1024 * 1024),
    )(xp, xp, w_mat, shift4)

    # Interleave the 4 phases and return to NCHW in one transpose + reshape.
    out6 = out4.reshape(N, H, W, 2, 2, Cout)
    y = jnp.transpose(out6, (0, 5, 1, 3, 2, 4))                  # (N, Cout, H, 2, W, 2)
    return y.reshape(N, Cout, 2 * H, 2 * W)


def _reference(x_nchw, w_oihw, conv_bias, gamma, beta, run_mean, run_var,
               eps=1e-5):
    # Pure-JAX (f32) reference for correctness checking.
    x = jnp.repeat(jnp.repeat(x_nchw, 2, axis=2), 2, axis=3)
    y = jax.lax.conv_general_dilated(
        x, w_oihw, window_strides=(1, 1), padding="SAME",
        dimension_numbers=("NCHW", "OIHW", "NCHW"))
    y = y + conv_bias.reshape(1, -1, 1, 1)
    y = (y - run_mean.reshape(1, -1, 1, 1)) / jnp.sqrt(
        run_var.reshape(1, -1, 1, 1) + eps)
    y = y * gamma.reshape(1, -1, 1, 1) + beta.reshape(1, -1, 1, 1)
    return jnp.maximum(y, 0.0)


if __name__ == "__main__":
    key = jax.random.PRNGKey(0)
    k_x, k_w, k_b, k_g, k_bt, k_m, k_v = jax.random.split(key, 7)

    N, Cin, Cout, H, W = 2, 4, 8, 16, 16

    x = jax.random.normal(k_x, (N, Cin, H, W), dtype=jnp.float32)
    w = jax.random.normal(k_w, (Cout, Cin, 3, 3), dtype=jnp.float32) * 0.1
    b = jax.random.normal(k_b, (Cout,), dtype=jnp.float32) * 0.1
    gamma = 1.0 + 0.1 * jax.random.normal(k_g, (Cout,), dtype=jnp.float32)
    beta = 0.1 * jax.random.normal(k_bt, (Cout,), dtype=jnp.float32)
    run_mean = 0.1 * jax.random.normal(k_m, (Cout,), dtype=jnp.float32)
    run_var = jnp.abs(1.0 + 0.1 * jax.random.normal(k_v, (Cout,),
                                                    dtype=jnp.float32))

    # row_tile=8 exercises the multi-row-tile + halo path (2 tiles per sample).
    out = up_conv_forward(x, w, b, gamma, beta, run_mean, run_var, row_tile=8)
    out = jax.block_until_ready(out)

    ref = _reference(x, w, b, gamma, beta, run_mean, run_var)
    assert out.shape == (N, Cout, 2 * H, 2 * W), out.shape
    # bf16 activations/weights (f32 accumulation) -> relaxed tolerance vs f32 ref.
    assert jnp.allclose(out, ref, atol=5e-2, rtol=5e-2), \
        float(jnp.max(jnp.abs(out - ref)))

    print("KERNEL_OK")
</pallas_src>

<mosaic_0001>
module attributes {stable_mosaic.version = 11 : i64} {
  func.func @_upconv_kernel(%arg0: i32, %arg1: i32, %arg2: memref<1x8x18x4xbf16, #tpu.memory_space<vmem>>, %arg3: memref<1x2x18x4xbf16, #tpu.memory_space<vmem>>, %arg4: memref<36x32xbf16, #tpu.memory_space<vmem>>, %arg5: memref<1x32xf32, #tpu.memory_space<vmem>>, %arg6: memref<1x8x16x32xf32, #tpu.memory_space<vmem>>) attributes {dimension_semantics = [#tpu.dimension_semantics<parallel>, #tpu.dimension_semantics<parallel>], iteration_bounds = array<i64: 2, 2>, scalar_prefetch = 0 : i64, scratch_operands = 0 : i64, tpu.core_type = #tpu.core_type<tc>, window_params = [{transform_indices = @transform_0, window_bounds = array<i64: 1, 8, 18, 4>}, {transform_indices = @transform_1, window_bounds = array<i64: 1, 2, 18, 4>}, {pipeline_mode = #tpu.pipeline_mode<synchronous>, transform_indices = @transform_2, window_bounds = array<i64: 36, 32>}, {pipeline_mode = #tpu.pipeline_mode<synchronous>, transform_indices = @transform_3, window_bounds = array<i64: 1, 32>}, {transform_indices = @transform_4, window_bounds = array<i64: 1, 8, 16, 32>}]} {
    %c0 = arith.constant 0 : index
    %c0_0 = arith.constant 0 : index
    %c0_1 = arith.constant 0 : index
    %c0_2 = arith.constant 0 : index
    %0 = vector.load %arg2[%c0, %c0_0, %c0_1, %c0_2] : memref<1x8x18x4xbf16, #tpu.memory_space<vmem>>, vector<1x8x18x4xbf16>
    %1 = vector.shape_cast %0 : vector<1x8x18x4xbf16> to vector<8x18x4xbf16>
    %c0_3 = arith.constant 0 : index
    %c0_4 = arith.constant 0 : index
    %c0_5 = arith.constant 0 : index
    %c0_6 = arith.constant 0 : index
    %2 = vector.load %arg3[%c0_3, %c0_4, %c0_5, %c0_6] : memref<1x2x18x4xbf16, #tpu.memory_space<vmem>>, vector<1x2x18x4xbf16>
    %3 = vector.shape_cast %2 : vector<1x2x18x4xbf16> to vector<2x18x4xbf16>
    %4 = tpu.concatenate %1, %3 in 0 : vector<8x18x4xbf16>, vector<2x18x4xbf16> -> vector<10x18x4xbf16>
    %5 = vector.extract_strided_slice %4 {offsets = [0, 0, 0], sizes = [10, 16, 4], strides = [1, 1, 1]} : vector<10x18x4xbf16> to vector<10x16x4xbf16>
    %6 = vector.extract_strided_slice %4 {offsets = [0, 1, 0], sizes = [10, 16, 4], strides = [1, 1, 1]} : vector<10x18x4xbf16> to vector<10x16x4xbf16>
    %7 = vector.extract_strided_slice %4 {offsets = [0, 2, 0], sizes = [10, 16, 4], strides = [1, 1, 1]} : vector<10x18x4xbf16> to vector<10x16x4xbf16>
    %8 = tpu.concatenate %5, %6, %7 in 2 : vector<10x16x4xbf16>, vector<10x16x4xbf16>, vector<10x16x4xbf16> -> vector<10x16x12xbf16>
    %9 = vector.extract_strided_slice %8 {offsets = [0, 0, 0], sizes = [8, 16, 12], strides = [1, 1, 1]} : vector<10x16x12xbf16> to vector<8x16x12xbf16>
    %10 = vector.extract_strided_slice %8 {offsets = [1, 0, 0], sizes = [8, 16, 12], strides = [1, 1, 1]} : vector<10x16x12xbf16> to vector<8x16x12xbf16>
    %11 = vector.extract_strided_slice %8 {offsets = [2, 0, 0], sizes = [8, 16, 12], strides = [1, 1, 1]} : vector<10x16x12xbf16> to vector<8x16x12xbf16>
    %12 = tpu.concatenate %9, %10, %11 in 2 : vector<8x16x12xbf16>, vector<8x16x12xbf16>, vector<8x16x12xbf16> -> vector<8x16x36xbf16>
    %13 = vector.shape_cast %12 : vector<8x16x36xbf16> to vector<128x36xbf16>
    %c0_7 = arith.constant 0 : index
    %c0_8 = arith.constant 0 : index
    %14 = vector.load %arg4[%c0_7, %c0_8] : memref<36x32xbf16, #tpu.memory_space<vmem>>, vector<36x32xbf16>
    %cst = arith.constant dense<0.000000e+00> : vector<128x32xf32>
    %15 = tpu.matmul %13, %14, %cst {dimension_numbers = #tpu.dot_dimension_numbers<[1], [0], [0], [1], [0, 0, 1, 1], [], []>} : vector<128x36xbf16>, vector<36x32xbf16>, vector<128x32xf32> -> vector<128x32xf32>
    %c0_9 = arith.constant 0 : index
    %c0_10 = arith.constant 0 : index
    %16 = vector.load %arg5[%c0_9, %c0_10] : memref<1x32xf32, #tpu.memory_space<vmem>>, vector<1x32xf32>
    %17 = vector.broadcast %16 : vector<1x32xf32> to vector<128x32xf32>
    %18 = arith.addf %15, %17 : vector<128x32xf32>
    %cst_11 = arith.constant 0.000000e+00 : f32
    %19 = vector.broadcast %cst_11 : f32 to vector<128x32xf32>
    %20 = arith.maximumf %18, %19 : vector<128x32xf32>
    %21 = vector.shape_cast %20 : vector<128x32xf32> to vector<8x16x32xf32>
    %c0_12 = arith.constant 0 : index
    %c0_13 = arith.constant 0 : index
    %c0_14 = arith.constant 0 : index
    %c0_15 = arith.constant 0 : index
    %22 = vector.load %arg6[%c0_12, %c0_13, %c0_14, %c0_15] : memref<1x8x16x32xf32, #tpu.memory_space<vmem>>, vector<1x8x16x32xf32>
    %23 = vector.shape_cast %22 : vector<1x8x16x32xf32> to vector<8x16x32xf32>
    %24 = vector.shape_cast %21 : vector<8x16x32xf32> to vector<1x8x16x32xf32>
    tpu.vector_store %arg6[%c0_12, %c0_13, %c0_14, %c0_15], %24 {strides = array<i32>} : memref<1x8x16x32xf32, #tpu.memory_space<vmem>>, vector<1x8x16x32xf32>,
    return
  }
  func.func @transform_0(%arg0: i32, %arg1: i32) -> (i32, i32, i32, i32) {
    %c0_i32 = arith.constant 0 : i32
    %c0_i32_0 = arith.constant 0 : i32
    %c0_i32_1 = arith.constant 0 : i32
    return %arg0, %arg1, %c0_i32, %c0_i32_0 : i32, i32, i32, i32
  }
  func.func @transform_1(%arg0: i32, %arg1: i32) -> (i32, i32, i32, i32) {
    %c1_i32 = arith.constant 1 : i32
    %0 = arith.addi %arg1, %c1_i32 : i32
    %c4_i32 = arith.constant 4 : i32
    %1 = arith.muli %0, %c4_i32 : i32
    %c0_i32 = arith.constant 0 : i32
    %c0_i32_0 = arith.constant 0 : i32
    %c0_i32_1 = arith.constant 0 : i32
    return %arg0, %1, %c0_i32, %c0_i32_0 : i32, i32, i32, i32
  }
  func.func @transform_2(%arg0: i32, %arg1: i32) -> (i32, i32) {
    %c0_i32 = arith.constant 0 : i32
    %c0_i32_0 = arith.constant 0 : i32
    %c0_i32_1 = arith.constant 0 : i32
    return %c0_i32, %c0_i32_0 : i32, i32
  }
  func.func @transform_3(%arg0: i32, %arg1: i32) -> (i32, i32) {
    %c0_i32 = arith.constant 0 : i32
    %c0_i32_0 = arith.constant 0 : i32
    %c0_i32_1 = arith.constant 0 : i32
    return %c0_i32, %c0_i32_0 : i32, i32
  }
  func.func @transform_4(%arg0: i32, %arg1: i32) -> (i32, i32, i32, i32) {
    %c0_i32 = arith.constant 0 : i32
    %c0_i32_0 = arith.constant 0 : i32
    %c0_i32_1 = arith.constant 0 : i32
    return %arg0, %arg1, %c0_i32, %c0_i32_0 : i32, i32, i32, i32
  }
}

</mosaic_0001>

<llo_original>
// kernel: tpu_custom_call.1
$region0: #{tpu_custom_call.1}
  #allocation0 [shape = 'u32[]', space=smem, size = 0x4, offset = 0x4, fixed_abs, tag = 'smem constant byte address 0x4 - core index']
  #allocation1 [shape = 'u32[144,128]{1,0:T(1,128)}', space=vmem, size = 0x12000, scoped, tag = 'internal scratch']
  %s0 = inlined_call_operand.vmem [shape: bf16[2,18,18,4], index: 0, kind: input, shape index: {}]
  %s1 = inlined_call_operand.vmem [shape: bf16[2,18,18,4], index: 1, kind: input, shape index: {}]
  %s2 = inlined_call_operand.vmem [shape: bf16[36,32], index: 2, kind: input, shape index: {}]
  %s3 = inlined_call_operand.vmem [shape: f32[1,32], index: 3, kind: input, shape index: {}]
  %s4 = inlined_call_operand.hbm [shape: f32[2,16,16,32], index: 4, kind: output, shape index: {}]
  %s5 = sld [smem:[#allocation0]]
  $region49: #{tpu_custom_call.1} parent=0
    _
  %s7 = ssub.s32 1, %s5
  %s8 = scalar_select 0, %s7, %s5
  $region1: #{tpu_custom_call.1} parent=0
    #allocation2 [shape = 'u8[131072]{0}', space=vmem, size = 0x20000, scoped, tag = 'output window, operand 0']
    #allocation3 [shape = 's32[2]{0}', space=sflag, size = 0x8, scoped, tag = 'scoped memory for tpu_custom_call.1']
    %9 = vsyncpa [#allocation3], 0
    %s10 = scalar_lea.sflag [#allocation3], 1
    %11 = vsyncpa %s10, 0
    loop: start=0, step=1, limit=6
    $region2: #{tpu_custom_call.1} parent=1 // loop_pre_header
      _
    $region3: #{tpu_custom_call.1} parent=1 // loop_header
      %s13 = sphi 0, %s17
      %p14 = scmp.ge.s32.totalorder %s13, 6
      %s20 = sphi 0, %s32
      %s21 = sphi 0, %s28
      %s22 = sphi 0, %s20
      %s23 = sphi 0, %s21
      %s24 = sphi 0, %s22
      %s25 = sphi 0, %s23
      %s37 = sphi 0, %s39
      %s40 = sphi 0, %s37
      %s41 = sphi 0, %s40
      %s57 = sphi 0, %s41
      %s69 = sphi 0, %s71
      %s72 = sphi 0, %s69
      %s73 = sphi 0, %s72
      %s89 = sphi 0, %s73
      %s93 = sphi 0, %s93
      %s95 = sphi 0, %s93
      %s96 = sphi 0, %s95
      %s110 = sphi 0, %s96
      %s114 = sphi 0, %s114
      %s116 = sphi 0, %s114
      %s117 = sphi 0, %s116
      %s131 = sphi 0, %s117
      %s139 = sphi 0, %s141
      %s142 = sphi 0, %s139
      %s143 = sphi 0, %s142
      %s159 = sphi 0, %s143
    $region4: #{tpu_custom_call.1} parent=1 // loop_header_branch
      %16 = sbr.rel (%p14) target = $region8
    $region5: #{tpu_custom_call.1} parent=1 // loop_body
      %s18 = ssub.s32 %s13, 1
      %s19 = ssub.s32 %s13, 2
      %s26 = sadd.s32 1, %s21
      %p27 = scmp.ge.s32.totalorder %s26, 2
      %s28 = scalar_select %p27, 0, %s26
      %s29 = sadd.s32 1, %s20
      %s30 = scalar_select %p27, %s29, %s20
      %p31 = scmp.ge.s32.totalorder %s30, 2
      %s32 = scalar_select %p31, 0, %s30
      %s33 = ssub.s32 %s20, %s32
      %s34 = ssub.s32 %s21, %s28
      %s35 = sor.u32 %s33, %s34
      %p36 = scmp.eq.s32.totalorder %s35, 0
      %s38 = sadd.s32 %s37, 1
      %s39 = scalar_select %p36, %s37, %s38
      %p42 = pneg %p36
      %p43 = scmp.eq.s32.totalorder %s13, 3
      %p44 = por %p42, %p43
      %p45 = scmp.ne.s32.totalorder %s37, %s40
      %p46 = scmp.eq.s32.totalorder %s13, 0
      %p47 = por %p45, %p46
      %p48 = scmp.ne.s32.totalorder %s37, %s40
      %p49 = scmp.eq.s32.totalorder %s18, 3
      %p50 = por %p48, %p49
      %p51 = scmp.ne.s32.totalorder %s40, %s41
      %p52 = scmp.eq.s32.totalorder %s18, 0
      %p53 = por %p51, %p52
      %p54 = scmp.ne.s32.totalorder %s40, %s41
      %p55 = scmp.eq.s32.totalorder %s19, 3
      %p56 = por %p54, %p55
      %p58 = scmp.ne.s32.totalorder %s41, %s57
      %p59 = scmp.eq.s32.totalorder %s19, 0
      %p60 = por %p58, %p59
      %s61 = sadd.s32 %s21, 1
      %s62 = smul.u32 %s61, 4
      %s63 = sadd.s32 %s28, 1
      %s64 = smul.u32 %s63, 4
      %s65 = ssub.s32 %s20, %s32
      %s66 = ssub.s32 %s62, %s64
      %s67 = sor.u32 %s65, %s66
      %p68 = scmp.eq.s32.totalorder %s67, 0
      %s70 = sadd.s32 %s69, 1
      %s71 = scalar_select %p68, %s69, %s70
      %p74 = pneg %p68
      %p75 = scmp.eq.s32.totalorder %s13, 3
      %p76 = por %p74, %p75
      %p77 = scmp.ne.s32.totalorder %s69, %s72
      %p78 = scmp.eq.s32.totalorder %s13, 0
      %p79 = por %p77, %p78
      %p80 = scmp.ne.s32.totalorder %s69, %s72
      %p81 = scmp.eq.s32.totalorder %s18, 3
      %p82 = por %p80, %p81
      %p83 = scmp.ne.s32.totalorder %s72, %s73
      %p84 = scmp.eq.s32.totalorder %s18, 0
      %p85 = por %p83, %p84
      %p86 = scmp.ne.s32.totalorder %s72, %s73
      %p87 = scmp.eq.s32.totalorder %s19, 3
      %p88 = por %p86, %p87
      %p90 = scmp.ne.s32.totalorder %s73, %s89
      %p91 = scmp.eq.s32.totalorder %s19, 0
      %p92 = por %p90, %p91
      %s94 = sadd.s32 %s93, 1
      %p97 = scmp.eq.s32.totalorder %s13, 3
      %p98 = scmp.ne.s32.totalorder %s93, %s95
      %p99 = scmp.eq.s32.totalorder %s13, 0
      %p100 = por %p98, %p99
      %p101 = scmp.ne.s32.totalorder %s93, %s95
      %p102 = scmp.eq.s32.totalorder %s18, 3
      %p103 = por %p101, %p102
      %p104 = scmp.ne.s32.totalorder %s95, %s96
      %p105 = scmp.eq.s32.totalorder %s18, 0
      %p106 = por %p104, %p105
      %p107 = scmp.ne.s32.totalorder %s95, %s96
      %p108 = scmp.eq.s32.totalorder %s19, 3
      %p109 = por %p107, %p108
      %p111 = scmp.ne.s32.totalorder %s96, %s110
      %p112 = scmp.eq.s32.totalorder %s19, 0
      %p113 = por %p111, %p112
      %s115 = sadd.s32 %s114, 1
      %p118 = scmp.eq.s32.totalorder %s13, 3
      %p119 = scmp.ne.s32.totalorder %s114, %s116
      %p120 = scmp.eq.s32.totalorder %s13, 0
      %p121 = por %p119, %p120
      %p122 = scmp.ne.s32.totalorder %s114, %s116
      %p123 = scmp.eq.s32.totalorder %s18, 3
      %p124 = por %p122, %p123
      %p125 = scmp.ne.s32.totalorder %s116, %s117
      %p126 = scmp.eq.s32.totalorder %s18, 0
      %p127 = por %p125, %p126
      %p128 = scmp.ne.s32.totalorder %s116, %s117
      %p129 = scmp.eq.s32.totalorder %s19, 3
      %p130 = por %p128, %p129
      %p132 = scmp.ne.s32.totalorder %s117, %s131
      %p133 = scmp.eq.s32.totalorder %s19, 0
      %p134 = por %p132, %p133
      %s135 = ssub.s32 %s20, %s32
      %s136 = ssub.s32 %s21, %s28
      %s137 = sor.u32 %s135, %s136
      %p138 = scmp.eq.s32.totalorder %s137, 0
      %s140 = sadd.s32 %s139, 1
      %s141 = scalar_select %p138, %s139, %s140
      %p144 = pneg %p138
      %p145 = scmp.eq.s32.totalorder %s13, 3
      %p146 = por %p144, %p145
      %p147 = scmp.ne.s32.totalorder %s139, %s142
      %p148 = scmp.eq.s32.totalorder %s13, 0
      %p149 = por %p147, %p148
      %p150 = scmp.ne.s32.totalorder %s139, %s142
      %p151 = scmp.eq.s32.totalorder %s18, 3
      %p152 = por %p150, %p151
      %p153 = scmp.ne.s32.totalorder %s142, %s143
      %p154 = scmp.eq.s32.totalorder %s18, 0
      %p155 = por %p153, %p154
      %p156 = scmp.ne.s32.totalorder %s142, %s143
      %p157 = scmp.eq.s32.totalorder %s19, 3
      %p158 = por %p156, %p157
      %p160 = scmp.ne.s32.totalorder %s143, %s159
      %p161 = scmp.eq.s32.totalorder %s19, 0
      %p162 = por %p160, %p161
      %p163 = scmp.le.s32.totalorder 1, %s13
      %p164 = scmp.lt.s32.totalorder %s13, 5
      %p165 = pnand %p163, %p164
      %p166 = pneg %p165
      // Predicated region
      $region9: #{tpu_custom_call.1} parent=5 // pred_check
        _
      $region10: #{tpu_custom_call.1} parent=5 // pred_check_branch
        %168 = sbr.rel (%p165) target = $region12
      $region11: #{tpu_custom_call.1} parent=5 // pred_region
        %s169 = ssub.s32 %s13, 1
        // Predicated region
        $region13: #{tpu_custom_call.1} parent=11 // pred_check
          %p170 = pneg %p106
        $region14: #{tpu_custom_call.1} parent=11 // pred_check_branch
          %172 = sbr.rel (%p170) target = $region16
        $region15: #{tpu_custom_call.1} parent=11 // pred_region
          _
        $region16: #{tpu_custom_call.1} parent=11 // pred_fallthru
          _
        // Predicated region
        $region17: #{tpu_custom_call.1} parent=11 // pred_check
          %p173 = pneg %p127
        $region18: #{tpu_custom_call.1} parent=11 // pred_check_branch
          %175 = sbr.rel (%p173) target = $region20
        $region19: #{tpu_custom_call.1} parent=11 // pred_region
          _
        $region20: #{tpu_custom_call.1} parent=11 // pred_fallthru
          _
      $region12: #{tpu_custom_call.1} parent=5 // pred_fallthru
        _
      %p176 = scmp.lt.s32.totalorder %s13, 4
      // Predicated region
      $region21: #{tpu_custom_call.1} parent=5 // pred_check
        %p177 = pneg %p176
      $region22: #{tpu_custom_call.1} parent=5 // pred_check_branch
        %179 = sbr.rel (%p177) target = $region24
      $region23: #{tpu_custom_call.1} parent=5 // pred_region
        // Predicated region
        $region25: #{tpu_custom_call.1} parent=23 // pred_check
          %p180 = pneg %p47
        $region26: #{tpu_custom_call.1} parent=23 // pred_check_branch
          %182 = sbr.rel (%p180) target = $region28
        $region27: #{tpu_custom_call.1} parent=23 // pred_region
          %s183 = smul.u32 8, %s21
          %s184 = ssub.s32 18, %s183
          %p185 = scmp.lt.s32.totalorder %s184, 8
          %s186 = scalar_select %p185, %s184, 8
          %s187 = smul.u32 64, %s186
          %s188 = smul.u32 %s187, 3
          %p189 = scmp.lt.s32.totalorder %s20, 1
          %s190 = scalar_select %p189, %s20, 1
          %p191 = scmp.lt.s32.totalorder %s183, 17
          %s192 = scalar_select %p191, %s183, 17
          %s193 = smul.addr %s192, 3
          %s194 = smul.addr %s190, 54
          %s195 = sadd.s32 %s193, %s194
          %s196 = smul.addr %s195, 4
          %s197 = scalar_lea.vmem %s0, %s196
          %s198 = smul.u32 8, %s21
          %s199 = ssub.s32 18, %s198
          %p200 = scmp.lt.s32.totalorder %s199, 8
          %s201 = scalar_select %p200, %s199, 8
          %s202 = smul.u32 64, %s201
          %s203 = smul.u32 %s202, 3
        $region28: #{tpu_custom_call.1} parent=23 // pred_fallthru
          _
        // Predicated region
        $region29: #{tpu_custom_call.1} parent=23 // pred_check
          %p204 = pneg %p79
        $region30: #{tpu_custom_call.1} parent=23 // pred_check_branch
          %206 = sbr.rel (%p204) target = $region32
        $region31: #{tpu_custom_call.1} parent=23 // pred_region
          %s207 = sadd.s32 %s21, 1
          %s208 = smul.u32 %s207, 4
          %s209 = smul.u32 2, %s208
          %p210 = scmp.lt.s32.totalorder %s20, 1
          %s211 = scalar_select %p210, %s20, 1
          %p212 = scmp.lt.s32.totalorder %s209, 17
          %s213 = scalar_select %p212, %s209, 17
          %s214 = smul.addr %s213, 3
          %s215 = smul.addr %s211, 54
          %s216 = sadd.s32 %s214, %s215
          %s217 = smul.addr %s216, 4
          %s218 = scalar_lea.vmem %s1, %s217
          %s219 = sadd.s32 %s21, 1
          %s220 = smul.u32 %s219, 4
          %s221 = smul.u32 2, %s220
        $region32: #{tpu_custom_call.1} parent=23 // pred_fallthru
          _
      $region24: #{tpu_custom_call.1} parent=5 // pred_fallthru
        _
      %p222 = scmp.le.s32.totalorder 1, %s13
      %p223 = scmp.lt.s32.totalorder %s13, 5
      %p224 = pnand %p222, %p223
      %p225 = pneg %p224
      // Predicated region
      $region33: #{tpu_custom_call.1} parent=5 // pred_check
        _
      $region34: #{tpu_custom_call.1} parent=5 // pred_check_branch
        %227 = sbr.rel (%p224) target = $region36
      $region35: #{tpu_custom_call.1} parent=5 // pred_region
        %s228 = ssub.s32 %s13, 1
        %s229 = smul.u32 8, %s23
        %s230 = ssub.s32 18, %s229
        %p231 = scmp.lt.s32.totalorder %s230, 8
        %s232 = scalar_select %p231, %s230, 8
        %s233 = smul.u32 64, %s232
        %s234 = smul.u32 %s233, 3
        %p235 = scmp.lt.s32.totalorder %s22, 1
        %s236 = scalar_select %p235, %s22, 1
        %p237 = scmp.lt.s32.totalorder %s229, 17
        %s238 = scalar_select %p237, %s229, 17
        %s239 = smul.addr %s238, 3
        %s240 = smul.addr %s236, 54
        %s241 = sadd.s32 %s239, %s240
        %s242 = smul.addr %s241, 4
        %s243 = scalar_lea.vmem %s0, %s242
        %p244 = pneg %p53
        %p245 = pneg %p50
        %s246 = sadd.s32 %s23, 1
        %s247 = smul.u32 %s246, 4
        %s248 = smul.u32 2, %s247
        %p249 = scmp.lt.s32.totalorder %s22, 1
        %s250 = scalar_select %p249, %s22, 1
        %p251 = scmp.lt.s32.totalorder %s248, 17
        %s252 = scalar_select %p251, %s248, 17
        %s253 = smul.addr %s252, 3
        %s254 = smul.addr %s250, 54
        %s255 = sadd.s32 %s253, %s254
        %s256 = smul.addr %s255, 4
        %s257 = scalar_lea.vmem %s1, %s256
        %p258 = pneg %p85
        %p259 = pneg %p82
        %p260 = pneg %p106
        %p261 = pneg %p103
        %p262 = pneg %p127
        %p263 = pneg %p124
        %p264 = pneg %p155
        %p265 = pneg %p152
        %s266 = sand.u32 %s142, 1
        %s267 = scalar_lea.sflag [#allocation3], %s266
        %s268 = sand.u32 %s142, 1
        %s269 = smul.addr %s268, 128
        %s270 = scalar_lea.vmem [#allocation2], %s269
        %s271 = smul.u32 8, %s23
        %s272 = ssub.s32 18, %s271
        %p273 = scmp.lt.s32.totalorder %s272, 8
        %s274 = scalar_select %p273, %s272, 8
        %s275 = smul.u32 64, %s274
        %s276 = smul.u32 %s275, 3
        %p277 = scmp.lt.s32.totalorder %s22, 1
        %s278 = scalar_select %p277, %s22, 1
        %p279 = scmp.lt.s32.totalorder %s271, 17
        %s280 = scalar_select %p279, %s271, 17
        %s281 = smul.addr %s280, 3
        %s282 = smul.addr %s278, 54
        %s283 = sadd.s32 %s281, %s282
        %s284 = smul.addr %s283, 4
        %s285 = scalar_lea.vmem %s0, %s284
        %s286 = smul.u32 8, %s23
        %s287 = ssub.s32 18, %s286
        %p288 = scmp.lt.s32.totalorder %s287, 8
        %s289 = scalar_select %p288, %s287, 8
        %s290 = smul.u32 64, %s289
        %s291 = smul.u32 %s290, 3
        %s292 = sadd.s32 %s23, 1
        %s293 = smul.u32 %s292, 4
        %s294 = smul.u32 2, %s293
        %p295 = scmp.lt.s32.totalorder %s22, 1
        %s296 = scalar_select %p295, %s22, 1
        %p297 = scmp.lt.s32.totalorder %s294, 17
        %s298 = scalar_select %p297, %s294, 17
        %s299 = smul.addr %s298, 3
        %s300 = smul.addr %s296, 54
        %s301 = sadd.s32 %s299, %s300
        %s302 = smul.addr %s301, 4
        %s303 = scalar_lea.vmem %s1, %s302
        %s304 = sadd.s32 %s23, 1
        %s305 = smul.u32 %s304, 4
        %s306 = smul.u32 2, %s305
        %s307 = smul.u32 8, %s23
        %v309 = vld [vmem:[%s285] sm:$0xf]
        %v310 = vld [vmem:[%s285 + $0x4] sm:$0xf]
        %v311 = vld [vmem:[%s285 + $0x8] sm:$0x1]
        %v312 = vld [vmem:[%s285 + $0xc] sm:$0xf]
        %v313 = vld [vmem:[%s285 + $0x10] sm:$0xf]
        %v314 = vld [vmem:[%s285 + $0x14] sm:$0x1]
        %v315 = vld [vmem:[%s285 + $0x18] sm:$0xf]
        %v316 = vld [vmem:[%s285 + $0x1c] sm:$0xf]
        %v317 = vld [vmem:[%s285 + $0x20] sm:$0x1]
        %v318 = vld [vmem:[%s285 + $0x24] sm:$0xf]
        %v319 = vld [vmem:[%s285 + $0x28] sm:$0xf]
        %v320 = vld [vmem:[%s285 + $0x2c] sm:$0x1]
        %v321 = vld [vmem:[%s285 + $0x30] sm:$0xf]
        %v322 = vld [vmem:[%s285 + $0x34] sm:$0xf]
        %v323 = vld [vmem:[%s285 + $0x38] sm:$0x1]
        %v324 = vld [vmem:[%s285 + $0x3c] sm:$0xf]
        %v325 = vld [vmem:[%s285 + $0x40] sm:$0xf]
        %v326 = vld [vmem:[%s285 + $0x44] sm:$0x1]
        %v327 = vld [vmem:[%s285 + $0x48] sm:$0xf]
        %v328 = vld [vmem:[%s285 + $0x4c] sm:$0xf]
        %v329 = vld [vmem:[%s285 + $0x50] sm:$0x1]
        %v330 = vld [vmem:[%s285 + $0x54] sm:$0xf]
        %v331 = vld [vmem:[%s285 + $0x58] sm:$0xf]
        %v332 = vld [vmem:[%s285 + $0x5c] sm:$0x1]
        %v333 = vld [vmem:[%s303] sm:$0xf]
        %v334 = vld [vmem:[%s303 + $0x4] sm:$0xf]
        %v335 = vld [vmem:[%s303 + $0x8] sm:$0x1]
        %v336 = vld [vmem:[%s303 + $0xc] sm:$0xf]
        %v337 = vld [vmem:[%s303 + $0x10] sm:$0xf]
        %v338 = vld [vmem:[%s303 + $0x14] sm:$0x1]
        %v359 = vunpack.c.l.b16 %v309
        %v360 = vunpack.c.l.b16 %v310
        %v361 = vunpack.c.l.b16 %v312
        %v362 = vunpack.c.l.b16 %v313
        %v363 = vunpack.c.l.b16 %v315
        %v364 = vunpack.c.l.b16 %v316
        %v365 = vunpack.c.l.b16 %v318
        %v366 = vunpack.c.l.b16 %v319
        %v367 = vunpack.c.l.b16 %v321
        %v368 = vunpack.c.l.b16 %v322
        %v369 = vunpack.c.l.b16 %v324
        %v370 = vunpack.c.l.b16 %v325
        %v371 = vunpack.c.l.b16 %v327
        %v372 = vunpack.c.l.b16 %v328
        %v373 = vunpack.c.l.b16 %v330
        %v374 = vunpack.c.l.b16 %v331
        %v375 = vunpack.c.l.b16 %v333
        %v376 = vunpack.c.l.b16 %v334
        %v377 = vunpack.c.l.b16 %v336
        %v378 = vunpack.c.l.b16 %v337
        %v379 = vpack.c.b16 %v360, %v359
        %v380 = vpack.c.b16 %v362, %v361
        %v381 = vpack.c.b16 %v364, %v363
        %v382 = vpack.c.b16 %v366, %v365
        %v383 = vpack.c.b16 %v368, %v367
        %v384 = vpack.c.b16 %v370, %v369
        %v385 = vpack.c.b16 %v372, %v371
        %v386 = vpack.c.b16 %v374, %v373
        %v387 = vpack.c.b16 %v376, %v375
        %v388 = vpack.c.b16 %v378, %v377
        %v399 = vunpack.c.l.b16 %v311
        %v400 = vunpack.c.l.b16 %v314
        %v401 = vunpack.c.l.b16 %v317
        %v402 = vunpack.c.l.b16 %v320
        %v403 = vunpack.c.l.b16 %v323
        %v404 = vunpack.c.l.b16 %v326
        %v405 = vunpack.c.l.b16 %v329
        %v406 = vunpack.c.l.b16 %v332
        %v407 = vunpack.c.l.b16 %v335
        %v408 = vunpack.c.l.b16 %v338
        %v409 = vpack.c.b16 %v399, %v399
        %v410 = vpack.c.b16 %v400, %v400
        %v411 = vpack.c.b16 %v401, %v401
        %v412 = vpack.c.b16 %v402, %v402
        %v413 = vpack.c.b16 %v403, %v403
        %v414 = vpack.c.b16 %v404, %v404
        %v415 = vpack.c.b16 %v405, %v405
        %v416 = vpack.c.b16 %v406, %v406
        %v417 = vpack.c.b16 %v407, %v407
        %v418 = vpack.c.b16 %v408, %v408
        %vm419 = vsmask.f32 7424
        %v421 = vshrl.u32 %v379, 16
        %v423 = vshll.u32 %v379, 16
        %v425 = vrot.slane %v423, 1
        %v426 = vor.u32 %v421, %v425
        %v428 = vshll.u32 %v409, 16
        %v430 = vrot.slane %v428, 1
        %v431 = vsel %vm419, %v426, %v430
        %v433 = vshrl.u32 %v380, 16
        %v435 = vshll.u32 %v380, 16
        %v437 = vrot.slane %v435, 1
        %v438 = vor.u32 %v433, %v437
        %v440 = vshll.u32 %v410, 16
        %v442 = vrot.slane %v440, 1
        %v443 = vsel %vm419, %v438, %v442
        %v445 = vshrl.u32 %v381, 16
        %v447 = vshll.u32 %v381, 16
        %v449 = vrot.slane %v447, 1
        %v450 = vor.u32 %v445, %v449
        %v452 = vshll.u32 %v411, 16
        %v454 = vrot.slane %v452, 1
        %v455 = vsel %vm419, %v450, %v454
        %v457 = vshrl.u32 %v382, 16
        %v459 = vshll.u32 %v382, 16
        %v461 = vrot.slane %v459, 1
        %v462 = vor.u32 %v457, %v461
        %v464 = vshll.u32 %v412, 16
        %v466 = vrot.slane %v464, 1
        %v467 = vsel %vm419, %v462, %v466
        %v469 = vshrl.u32 %v383, 16
        %v471 = vshll.u32 %v383, 16
        %v473 = vrot.slane %v471, 1
        %v474 = vor.u32 %v469, %v473
        %v476 = vshll.u32 %v413, 16
        %v478 = vrot.slane %v476, 1
        %v479 = vsel %vm419, %v474, %v478
        %v481 = vshrl.u32 %v384, 16
        %v483 = vshll.u32 %v384, 16
        %v485 = vrot.slane %v483, 1
        %v486 = vor.u32 %v481, %v485
        %v488 = vshll.u32 %v414, 16
        %v490 = vrot.slane %v488, 1
        %v491 = vsel %vm419, %v486, %v490
        %v493 = vshrl.u32 %v385, 16
        %v495 = vshll.u32 %v385, 16
        %v497 = vrot.slane %v495, 1
        %v498 = vor.u32 %v493, %v497
        %v500 = vshll.u32 %v415, 16
        %v502 = vrot.slane %v500, 1
        %v503 = vsel %vm419, %v498, %v502
        %v505 = vshrl.u32 %v386, 16
        %v507 = vshll.u32 %v386, 16
        %v509 = vrot.slane %v507, 1
        %v510 = vor.u32 %v505, %v509
        %v512 = vshll.u32 %v416, 16
        %v514 = vrot.slane %v512, 1
        %v515 = vsel %vm419, %v510, %v514
        %v517 = vshrl.u32 %v387, 16
        %v519 = vshll.u32 %v387, 16
        %v521 = vrot.slane %v519, 1
        %v522 = vor.u32 %v517, %v521
        %v524 = vshll.u32 %v417, 16
        %v526 = vrot.slane %v524, 1
        %v527 = vsel %vm419, %v522, %v526
        %v529 = vshrl.u32 %v388, 16
        %v531 = vshll.u32 %v388, 16
        %v533 = vrot.slane %v531, 1
        %v534 = vor.u32 %v529, %v533
        %v536 = vshll.u32 %v418, 16
        %v538 = vrot.slane %v536, 1
        %v539 = vsel %vm419, %v534, %v538
        %540 = vrot.lane.b32.xlu0 %v431, 4
        %v541 = vpop.permute.xlu0 %540
        %542 = vrot.lane.b32.xlu0 %v443, 4
        %v543 = vpop.permute.xlu0 %542
        %544 = vrot.lane.b32.xlu0 %v455, 4
        %v545 = vpop.permute.xlu0 %544
        %546 = vrot.lane.b32.xlu0 %v467, 4
        %v547 = vpop.permute.xlu0 %546
        %548 = vrot.lane.b32.xlu0 %v479, 4
        %v549 = vpop.permute.xlu0 %548
        %550 = vrot.lane.b32.xlu0 %v491, 4
        %v551 = vpop.permute.xlu0 %550
        %552 = vrot.lane.b32.xlu0 %v503, 4
        %v553 = vpop.permute.xlu0 %552
        %554 = vrot.lane.b32.xlu0 %v515, 4
        %v555 = vpop.permute.xlu0 %554
        %556 = vrot.lane.b32.xlu0 %v527, 4
        %v557 = vpop.permute.xlu0 %556
        %558 = vrot.lane.b32.xlu0 %v539, 4
        %v559 = vpop.permute.xlu0 %558
        %vm560 = vcmask 1046528
        %v561 = vrot.slane %v379, 1
        %v562 = vrot.slane %v409, 1
        %v563 = vsel %vm560, %v561, %v562
        %v564 = vrot.slane %v380, 1
        %v565 = vrot.slane %v410, 1
        %v566 = vsel %vm560, %v564, %v565
        %v567 = vrot.slane %v381, 1
        %v568 = vrot.slane %v411, 1
        %v569 = vsel %vm560, %v567, %v568
        %v570 = vrot.slane %v382, 1
        %v571 = vrot.slane %v412, 1
        %v572 = vsel %vm560, %v570, %v571
        %v573 = vrot.slane %v383, 1
        %v574 = vrot.slane %v413, 1
        %v575 = vsel %vm560, %v573, %v574
        %v576 = vrot.slane %v384, 1
        %v577 = vrot.slane %v414, 1
        %v578 = vsel %vm560, %v576, %v577
        %v579 = vrot.slane %v385, 1
        %v580 = vrot.slane %v415, 1
        %v581 = vsel %vm560, %v579, %v580
        %v582 = vrot.slane %v386, 1
        %v583 = vrot.slane %v416, 1
        %v584 = vsel %vm560, %v582, %v583
        %v585 = vrot.slane %v387, 1
        %v586 = vrot.slane %v417, 1
        %v587 = vsel %vm560, %v585, %v586
        %v588 = vrot.slane %v388, 1
        %v589 = vrot.slane %v418, 1
        %v590 = vsel %vm560, %v588, %v589
        %591 = vrot.lane.b32.xlu0 %v563, 8
        %v592 = vpop.permute.xlu0 %591
        %593 = vrot.lane.b32.xlu0 %v566, 8
        %v594 = vpop.permute.xlu0 %593
        %595 = vrot.lane.b32.xlu0 %v569, 8
        %v596 = vpop.permute.xlu0 %595
        %597 = vrot.lane.b32.xlu0 %v572, 8
        %v598 = vpop.permute.xlu0 %597
        %599 = vrot.lane.b32.xlu0 %v575, 8
        %v600 = vpop.permute.xlu0 %599
        %601 = vrot.lane.b32.xlu0 %v578, 8
        %v602 = vpop.permute.xlu0 %601
        %603 = vrot.lane.b32.xlu0 %v581, 8
        %v604 = vpop.permute.xlu0 %603
        %605 = vrot.lane.b32.xlu0 %v584, 8
        %v606 = vpop.permute.xlu0 %605
        %607 = vrot.lane.b32.xlu0 %v587, 8
        %v608 = vpop.permute.xlu0 %607
        %609 = vrot.lane.b32.xlu0 %v590, 8
        %v610 = vpop.permute.xlu0 %609
        %vm611 = vcmask 31744
        %v613 = vsel %vm611, %v379, %v541
        %v615 = vsel %vm611, %v380, %v543
        %v617 = vsel %vm611, %v381, %v545
        %v619 = vsel %vm611, %v382, %v547
        %v621 = vsel %vm611, %v383, %v549
        %v623 = vsel %vm611, %v384, %v551
        %v625 = vsel %vm611, %v385, %v553
        %v627 = vsel %vm611, %v386, %v555
        %v629 = vsel %vm611, %v387, %v557
        %v631 = vsel %vm611, %v388, %v559
        %vm632 = vcmask 64512
        %v634 = vsel %vm632, %v613, %v592
        %v636 = vsel %vm632, %v615, %v594
        %v638 = vsel %vm632, %v617, %v596
        %v640 = vsel %vm632, %v619, %v598
        %v642 = vsel %vm632, %v621, %v600
        %v644 = vsel %vm632, %v623, %v602
        %v646 = vsel %vm632, %v625, %v604
        %v648 = vsel %vm632, %v627, %v606
        %v650 = vsel %vm632, %v629, %v608
        %v652 = vsel %vm632, %v631, %v610
        %661 = vrot.lane.b32.xlu0 %v636, 12
        %v662 = vpop.permute.xlu0 %661
        %663 = vrot.lane.b32.xlu0 %v638, 12
        %v664 = vpop.permute.xlu0 %663
        %665 = vrot.lane.b32.xlu0 %v640, 12
        %v666 = vpop.permute.xlu0 %665
        %667 = vrot.lane.b32.xlu0 %v642, 12
        %v668 = vpop.permute.xlu0 %667
        %669 = vrot.lane.b32.xlu0 %v644, 12
        %v670 = vpop.permute.xlu0 %669
        %671 = vrot.lane.b32.xlu0 %v646, 12
        %v672 = vpop.permute.xlu0 %671
        %673 = vrot.lane.b32.xlu0 %v648, 12
        %v674 = vpop.permute.xlu0 %673
        %675 = vrot.lane.b32.xlu0 %v650, 12
        %v676 = vpop.permute.xlu0 %675
        %678 = vrot.lane.b32.xlu0 %v638, 24
        %v679 = vpop.permute.xlu0 %678
        %680 = vrot.lane.b32.xlu0 %v640, 24
        %v681 = vpop.permute.xlu0 %680
        %682 = vrot.lane.b32.xlu0 %v642, 24
        %v683 = vpop.permute.xlu0 %682
        %684 = vrot.lane.b32.xlu0 %v644, 24
        %v685 = vpop.permute.xlu0 %684
        %686 = vrot.lane.b32.xlu0 %v646, 24
        %v687 = vpop.permute.xlu0 %686
        %688 = vrot.lane.b32.xlu0 %v648, 24
        %v689 = vpop.permute.xlu0 %688
        %690 = vrot.lane.b32.xlu0 %v650, 24
        %v691 = vpop.permute.xlu0 %690
        %692 = vrot.lane.b32.xlu0 %v652, 24
        %v693 = vpop.permute.xlu0 %692
        %vm694 = vcmask 97280
        %v696 = vsel %vm694, %v634, %v662
        %v698 = vsel %vm694, %v636, %v664
        %v700 = vsel %vm694, %v638, %v666
        %v702 = vsel %vm694, %v640, %v668
        %v704 = vsel %vm694, %v642, %v670
        %v706 = vsel %vm694, %v644, %v672
        %v708 = vsel %vm694, %v646, %v674
        %v710 = vsel %vm694, %v648, %v676
        %vm711 = vcmask 195584
        %v713 = vsel %vm711, %v696, %v679
        %v715 = vsel %vm711, %v698, %v681
        %v717 = vsel %vm711, %v700, %v683
        %v719 = vsel %vm711, %v702, %v685
        %v721 = vsel %vm711, %v704, %v687
        %v723 = vsel %vm711, %v706, %v689
        %v725 = vsel %vm711, %v708, %v691
        %v727 = vsel %vm711, %v710, %v693
        %v728 = vld [vmem:[%s2] sm:$0xf]
        %v729 = vld [vmem:[%s2 + $0x4] sm:$0xf]
        %v730 = vld [vmem:[%s2 + $0x8] sm:$0xf]
        %v731 = vld [vmem:[%s2 + $0xc] sm:$0xf]
        %v732 = vld [vmem:[%s2 + $0x10] sm:$0x3]
        %v733 = vld [vmem:[%s3] sm:$0x1]
        %v735 = vlaneseq
        %v736 = vshrl.u32 %v735, 7
        %v737 = vsub.s32 0, %v736
        %v738 = vrot.slane %v733, %v737
        %v745 = vunpack.c.l.b16 %v728
        %v746 = vunpack.c.l.b16 %v729
        %v747 = vunpack.c.l.b16 %v730
        %v748 = vunpack.c.l.b16 %v731
        %v749 = vunpack.c.l.b16 %v732
        %v750 = vpack.c.b16 %v746, %v745
        %v751 = vpack.c.b16 %v748, %v747
        %v752 = vpack.c.b16 %v749, %v749
        %vm755 = vcmask 293888
        %v756 = vsel %vm755, %v713, 0
        %v758 = vsel %vm755, %v715, 0
        %v760 = vsel %vm755, %v717, 0
        %v762 = vsel %vm755, %v719, 0
        %v764 = vsel %vm755, %v721, 0
        %v766 = vsel %vm755, %v723, 0
        %v768 = vsel %vm755, %v725, 0
        %v770 = vsel %vm755, %v727, 0
        %vm772 = vcmask 1041408
        %v774 = vsel %vm772, %v752, 0
        %776 = vmatprep.subr.bf16.mxu0 0
        %777 = vmatpush1.bf16.msra.mxu0 0
        %778 = vmatprep.subr.bf16.mxu0 0
        %779 = vmatpush1.bf16.msra.mxu0 0
        %780 = vmatprep.subr.bf16.mxu0 0
        %781 = vmatpush1.bf16.msra.mxu0 0
        %782 = vmatprep.subr.bf16.mxu0 0
        %783 = vmatpush1.bf16.msra.mxu0 0
        %784 = vmatprep.subr.bf16.mxu0 0
        %785 = vmatpush1.bf16.msra.mxu0 0
        %786 = vmatprep.subr.bf16.mxu0 0
        %787 = vmatpush1.bf16.msra.mxu0 %v774
        %788 = vmatprep.subr.bf16.mxu0 0
        %789 = vmatpush1.bf16.msra.mxu0 %v751
        %790 = vmatprep.subr.bf16.mxu0 0
        %791 = vmatpush1.bf16.msra.mxu0 %v750
        %792 = vmatprep.subr.bf16.mxu0 0
        %793 = vmatpush2.bf16.msra.mxu0 0
        %794 = vmatprep.subr.bf16.mxu0 0
        %795 = vmatpush2.bf16.msra.mxu0 0
        %796 = vmatprep.subr.bf16.mxu0 0
        %797 = vmatpush2.bf16.msra.mxu0 0
        %798 = vmatprep.subr.bf16.mxu0 0
        %799 = vmatpush2.bf16.msra.mxu0 0
        %800 = vmatprep.subr.bf16.mxu0 0
        %801 = vmatpush2.bf16.msra.mxu0 0
        %802 = vmatprep.subr.bf16.mxu0 0
        %803 = vmatpush2.bf16.msra.mxu0 0
        %804 = vmatprep.subr.bf16.mxu0 0
        %805 = vmatpush2.bf16.msra.mxu0 0
        %806 = vmatprep.subr.bf16.mxu0 0
        %807 = vmatpush2.bf16.msra.mxu0 0
        %808 = vmatprep.mubr.bf16.mxu0 0
        %809 = vmatmul.mubr.bf16.gmra.mxu0 %v756
        %v810 = vpop.f32.mrf.mxu0
        %v811 = vadd.f32 %v738, %v810
        %v812 = vpop.f32.mrf.mxu0
        %v813 = vpop.f32.mrf.mxu0
        %v814 = vadd.f32 %v738, %v813
        %v815 = vpop.f32.mrf.mxu0
        %816 = vmatprep.mubr.bf16.mxu0 0
        %817 = vmatmul.mubr.bf16.gmra.mxu0 %v758
        %v818 = vpop.f32.mrf.mxu0
        %v819 = vadd.f32 %v738, %v818
        %v820 = vpop.f32.mrf.mxu0
        %v821 = vpop.f32.mrf.mxu0
        %v822 = vadd.f32 %v738, %v821
        %v823 = vpop.f32.mrf.mxu0
        %824 = vmatprep.mubr.bf16.mxu0 0
        %825 = vmatmul.mubr.bf16.gmra.mxu0 %v760
        %v826 = vpop.f32.mrf.mxu0
        %v827 = vadd.f32 %v738, %v826
        %v828 = vpop.f32.mrf.mxu0
        %v829 = vpop.f32.mrf.mxu0
        %v830 = vadd.f32 %v738, %v829
        %v831 = vpop.f32.mrf.mxu0
        %832 = vmatprep.mubr.bf16.mxu0 0
        %833 = vmatmul.mubr.bf16.gmra.mxu0 %v762
        %v834 = vpop.f32.mrf.mxu0
        %v835 = vadd.f32 %v738, %v834
        %v836 = vpop.f32.mrf.mxu0
        %v837 = vpop.f32.mrf.mxu0
        %v838 = vadd.f32 %v738, %v837
        %v839 = vpop.f32.mrf.mxu0
        %840 = vmatprep.mubr.bf16.mxu0 0
        %841 = vmatmul.mubr.bf16.gmra.mxu0 %v764
        %v842 = vpop.f32.mrf.mxu0
        %v843 = vadd.f32 %v738, %v842
        %v844 = vpop.f32.mrf.mxu0
        %v845 = vpop.f32.mrf.mxu0
        %v846 = vadd.f32 %v738, %v845
        %v847 = vpop.f32.mrf.mxu0
        %848 = vmatprep.mubr.bf16.mxu0 0
        %849 = vmatmul.mubr.bf16.gmra.mxu0 %v766
        %v850 = vpop.f32.mrf.mxu0
        %v851 = vadd.f32 %v738, %v850
        %v852 = vpop.f32.mrf.mxu0
        %v853 = vpop.f32.mrf.mxu0
        %v854 = vadd.f32 %v738, %v853
        %v855 = vpop.f32.mrf.mxu0
        %856 = vmatprep.mubr.bf16.mxu0 0
        %857 = vmatmul.mubr.bf16.gmra.mxu0 %v768
        %v858 = vpop.f32.mrf.mxu0
        %v859 = vadd.f32 %v738, %v858
        %v860 = vpop.f32.mrf.mxu0
        %v861 = vpop.f32.mrf.mxu0
        %v862 = vadd.f32 %v738, %v861
        %v863 = vpop.f32.mrf.mxu0
        %864 = vmatprep.mubr.bf16.mxu0 0
        %865 = vmatmul.mubr.bf16.gmra.mxu0 %v770
        %v866 = vpop.f32.mrf.mxu0
        %v867 = vadd.f32 %v738, %v866
        %v868 = vpop.f32.mrf.mxu0
        %v869 = vpop.f32.mrf.mxu0
        %v870 = vadd.f32 %v738, %v869
        %v871 = vpop.f32.mrf.mxu0
        %872 = vdwg.mxu0
        %v873 = vmax.f32 %v811, 0.0
        %v874 = vmax.f32 %v814, 0.0
        %v875 = vmax.f32 %v819, 0.0
        %v876 = vmax.f32 %v822, 0.0
        %v877 = vmax.f32 %v827, 0.0
        %v878 = vmax.f32 %v830, 0.0
        %v879 = vmax.f32 %v835, 0.0
        %v880 = vmax.f32 %v838, 0.0
        %v881 = vmax.f32 %v843, 0.0
        %v882 = vmax.f32 %v846, 0.0
        %v883 = vmax.f32 %v851, 0.0
        %v884 = vmax.f32 %v854, 0.0
        %v885 = vmax.f32 %v859, 0.0
        %v886 = vmax.f32 %v862, 0.0
        %v887 = vmax.f32 %v867, 0.0
        %v888 = vmax.f32 %v870, 0.0
        %vm889 = vcmask 261120
        %890 = vst.msk [vmem:[%s270] sm:$0xff] %vm889, %v873
        %891 = vst.msk [vmem:[%s270 + $0x8] sm:$0xff] %vm889, %v874
        %892 = vst.msk [vmem:[%s270 + $0x10] sm:$0xff] %vm889, %v875
        %893 = vst.msk [vmem:[%s270 + $0x18] sm:$0xff] %vm889, %v876
        %894 = vst.msk [vmem:[%s270 + $0x20] sm:$0xff] %vm889, %v877
        %895 = vst.msk [vmem:[%s270 + $0x28] sm:$0xff] %vm889, %v878
        %896 = vst.msk [vmem:[%s270 + $0x30] sm:$0xff] %vm889, %v879
        %897 = vst.msk [vmem:[%s270 + $0x38] sm:$0xff] %vm889, %v880
        %898 = vst.msk [vmem:[%s270 + $0x40] sm:$0xff] %vm889, %v881
        %899 = vst.msk [vmem:[%s270 + $0x48] sm:$0xff] %vm889, %v882
        %900 = vst.msk [vmem:[%s270 + $0x50] sm:$0xff] %vm889, %v883
        %901 = vst.msk [vmem:[%s270 + $0x58] sm:$0xff] %vm889, %v884
        %902 = vst.msk [vmem:[%s270 + $0x60] sm:$0xff] %vm889, %v885
        %903 = vst.msk [vmem:[%s270 + $0x68] sm:$0xff] %vm889, %v886
        %904 = vst.msk [vmem:[%s270 + $0x70] sm:$0xff] %vm889, %v887
        %905 = vst.msk [vmem:[%s270 + $0x78] sm:$0xff] %vm889, %v888
        %s906 = sand.u32 %s142, 1
        %s907 = scalar_lea.sflag [#allocation3], %s906
        %s908 = sand.u32 %s142, 1
        %s909 = smul.addr %s908, 128
        %s910 = scalar_lea.vmem [#allocation2], %s909
        // Predicated region
        $region37: #{tpu_custom_call.1} parent=35 // pred_check
          %p911 = pneg %p152
        $region38: #{tpu_custom_call.1} parent=35 // pred_check_branch
          %913 = sbr.rel (%p911) target = $region40
        $region39: #{tpu_custom_call.1} parent=35 // pred_region
          %s914 = smul.u32 8, %s23
          %s916 = ssub.s32 2048, 2048
          %917 = vsyncadd %s907, %s916
          %s918 = smul.addr %s914, 2
          %s919 = smul.addr %s22, 32
          %s920 = sadd.s32 %s918, %s919
          %s921 = smul.addr %s920, 128
          %s922 = scalar_lea.hbm %s4, %s921
          %s923 = sshll.u32 %s910, 4
          %s924 = int_to_ptr.vmem [resolvable:$true] %s923
          %929 = dma.vmem_to_hbm [thread:$0]  %s924, 2048, %s922, %s907, 128, 128, 8
        $region40: #{tpu_custom_call.1} parent=35 // pred_fallthru
          _
      $region36: #{tpu_custom_call.1} parent=5 // pred_fallthru
        _
      %p930 = scmp.le.s32.totalorder 2, %s13
      // Predicated region
      $region41: #{tpu_custom_call.1} parent=5 // pred_check
        %p931 = pneg %p930
      $region42: #{tpu_custom_call.1} parent=5 // pred_check_branch
        %933 = sbr.rel (%p931) target = $region44
      $region43: #{tpu_custom_call.1} parent=5 // pred_region
        %s934 = ssub.s32 %s13, 2
        // Predicated region
        $region45: #{tpu_custom_call.1} parent=43 // pred_check
          %p935 = pneg %p158
        $region46: #{tpu_custom_call.1} parent=43 // pred_check_branch
          %937 = sbr.rel (%p935) target = $region48
        $region47: #{tpu_custom_call.1} parent=43 // pred_region
          %s938 = sand.u32 %s143, 1
          %s939 = scalar_lea.sflag [#allocation3], %s938
          %s940 = sand.u32 %s143, 1
          %s941 = smul.addr %s940, 128
          %s942 = scalar_lea.vmem [#allocation2], %s941
          %943 = dma.done %s939, 2048
        $region48: #{tpu_custom_call.1} parent=43 // pred_fallthru
          _
      $region44: #{tpu_custom_call.1} parent=5 // pred_fallthru
        _
    $region6: #{tpu_custom_call.1} parent=1 // loop_footer
      %s17 = sadd.s32 1, %s13
    $region7: #{tpu_custom_call.1} parent=1 // loop_footer_branch
      %12 = sbr.rel target = $region3
    $region8: #{tpu_custom_call.1} parent=1 // loop_exit
      _
    %944 = vsyncpa [#allocation3], 1
    %s945 = scalar_lea.sflag [#allocation3], 1
    %946 = vsyncpa %s945, 1

</llo_original>
